<compile_context>
chip_gen: v5e
topology: v5e:2x2
jax: 0.10.0
libtpu: 0.0.40
codegen_flags: <defaults>
</compile_context>

<pallas_src>
import jax
import jax.numpy as jnp
from jax.experimental import pallas as pl
from jax.experimental.pallas import tpu as pltpu


# ----------------------------------------------------------------------------
# Kernel
# ----------------------------------------------------------------------------
def _make_silu_kernel(compute_dtype, approx_recip):
    cdt = jnp.dtype(compute_dtype)

    def kernel(x_ref, o_ref):
        x = x_ref[...].astype(cdt)
        if approx_recip:
            # v7x: keep the divide on the EUP (vrcp) so the VALU slot does not
            # become the saturating slot at v7x's higher per-TC HBM rate.
            # pl.reciprocal is fed f32 (safe on every generation); exp stays in
            # the compute dtype so bf16 inputs keep packed vregs on the VPU.
            den = jnp.exp(-x).astype(jnp.float32) + 1.0
            y = x.astype(jnp.float32) * pl.reciprocal(den, approx=True)
        else:
            # v5e/v6e: HBM-bound, an exact sigmoid is hidden under the DMA.
            y = x * jax.nn.sigmoid(x)
        o_ref[...] = y.astype(o_ref.dtype)

    return kernel


def _silu_xla(v, compute_dtype, out_dtype):
    """Tiny epilogue for the <128-element ragged tail."""
    vf = v.astype(compute_dtype)
    return (vf * jax.nn.sigmoid(vf)).astype(out_dtype)


# ----------------------------------------------------------------------------
# Per-generation tuning
# ----------------------------------------------------------------------------
def _tpu_generation():
    try:
        kind = jax.devices()[0].device_kind.lower()
    except Exception:
        return 6
    if "v7" in kind or "tpu7" in kind or "7x" in kind:
        return 7
    if any(t in kind for t in ("v5", "v4", "v3", "v2")):
        return 5
    return 6


def _tuning_for_generation(gen):
    """(target_block_bytes, vmem_limit_bytes) per generation."""
    if gen <= 5:
        # v5e: 16 MiB scoped-VMEM default; 2 MiB blocks (x4 double-buffered
        # in+out = 8 MiB) already saturate its ~820 GB/s HBM.
        return 2 * 1024 * 1024, None
    if gen >= 7:
        # v7x: 64 MiB physical VMEM, ~2.3x per-TC HBM BW -> bigger blocks so
        # the 0.35 us/step overhead stays negligible; raise the scoped limit
        # explicitly (8 MiB x 4 = 32 MiB, under the 48 MiB ceiling).
        return 8 * 1024 * 1024, 48 << 20
    # v6e: 32 MiB scoped default; 4 MiB blocks (x4 = 16 MiB) fit comfortably.
    return 4 * 1024 * 1024, None


# ----------------------------------------------------------------------------
# Tile selection
# ----------------------------------------------------------------------------
def _pick_tile_rows(rows, lanes, itemsize, target_block_bytes):
    """Sublane-aligned row tile.

    Rules (per perf review):
      * byte budget -> row budget (multiple of 8),
      * on mid/large inputs cap the tile so the grid has >= ~4 steps
        (pipeline overlap of writeback/prefetch; prerequisite for v7x to use
        both TensorCores on the "parallel" grid axis),
      * prefer an exact divisor of `rows` (no masked partial block) but never
        shrink below ~half the budget to find one — a masked final block is
        nearly free, a tiny 8-row tile is not.
    """
    if rows <= 8:
        return rows
    budget = max(8, (target_block_bytes // (lanes * itemsize)) // 8 * 8)
    if rows >= 32:
        budget = min(budget, max(8, (rows // 4) // 8 * 8))
    if rows <= budget:
        return rows
    tile = budget
    for cand in range(tile, max(tile // 2, 7), -8):
        if rows % cand == 0:
            return cand
    return tile  # non-dividing: Pallas masks the partial last block.


# ----------------------------------------------------------------------------
# pallas_call wrapper for a lane-dense (rows, lanes) slab
# ----------------------------------------------------------------------------
def _silu_2d(x2d, tile_rows, *, kernel, cost_n, itemsize, vmem_limit_bytes):
    rows, lanes = x2d.shape
    grid = (pl.cdiv(rows, tile_rows),)
    return pl.pallas_call(
        kernel,
        out_shape=jax.ShapeDtypeStruct((rows, lanes), x2d.dtype),
        grid_spec=pltpu.PrefetchScalarGridSpec(
            num_scalar_prefetch=0,
            grid=grid,
            # Default Buffered(2) pipelining: the kernel is HBM-bound, deeper
            # buffering only eats VMEM.
            in_specs=[pl.BlockSpec((tile_rows, lanes), lambda i: (i, 0))],
            out_specs=pl.BlockSpec((tile_rows, lanes), lambda i: (i, 0)),
        ),
        compiler_params=pltpu.CompilerParams(
            dimension_semantics=("parallel",),
            vmem_limit_bytes=vmem_limit_bytes,
        ),
        cost_estimate=pl.CostEstimate(
            flops=4 * cost_n,
            transcendentals=cost_n,
            bytes_accessed=2 * cost_n * itemsize,
        ),
    )(x2d)


# ----------------------------------------------------------------------------
# Public entry point (== SiLU.forward)
# ----------------------------------------------------------------------------
def silu_pallas(x):
    """Elementwise SiLU via a Pallas TPU kernel."""
    orig_shape = x.shape
    if x.size == 0:
        return x
    if not jnp.issubdtype(x.dtype, jnp.floating):
        # torch.sigmoid is undefined for integer tensors; follow JAX's
        # convention and promote to float32.
        x = x.astype(jnp.float32)
    dtype = x.dtype
    itemsize = jnp.dtype(dtype).itemsize
    n = x.size

    gen = _tpu_generation()
    target_block_bytes, vmem_limit_bytes = _tuning_for_generation(gen)
    compute_dtype = dtype if (dtype == jnp.bfloat16 and gen >= 6) else jnp.float32
    kernel = _make_silu_kernel(compute_dtype, approx_recip=(gen >= 7))

    flat = jnp.ravel(x)
    n_main = (n // 128) * 128

    if n_main == 0:
        # Fewer than 128 elements: the XLA epilogue is cheaper than any launch.
        return _silu_xla(flat, compute_dtype, dtype).reshape(orig_shape)

    if n_main == n:
        main, tail_out = flat, None
    else:
        # Ragged size: kernel on the 128-aligned prefix, tiny XLA tail.
        # Avoids the pad + slice full-array HBM round trips of the old path.
        main = flat[:n_main]
        tail_out = _silu_xla(flat[n_main:], compute_dtype, dtype)

    # Widest lane dim (multiple of 128) dividing n_main exactly -> the
    # flat -> (rows, lanes) reshape is layout-only (no padding, no copies).
    lanes = next(c for c in (2048, 1024, 512, 256, 128) if n_main % c == 0)
    rows = n_main // lanes
    x2d = main.reshape(rows, lanes)
    tile_rows = _pick_tile_rows(rows, lanes, itemsize, target_block_bytes)

    out2d = _silu_2d(
        x2d,
        tile_rows,
        kernel=kernel,
        cost_n=n_main,
        itemsize=itemsize,
        vmem_limit_bytes=vmem_limit_bytes,
    )

    if tail_out is None:
        return out2d.reshape(orig_shape)
    return jnp.concatenate([out2d.reshape(-1), tail_out]).reshape(orig_shape)


# ----------------------------------------------------------------------------
# Self-test
# ----------------------------------------------------------------------------
if __name__ == "__main__":
    key = jax.random.PRNGKey(0)
    k1, k2, k3 = jax.random.split(key, 3)

    # Tolerance note: exact sigmoid on v5e/v6e (1e-6-level error); the looser
    # 2e-3 bound also covers the v7x approx-reciprocal (EUP vrcp) path.
    TOL = dict(atol=2e-3, rtol=2e-3)

    # NCDHW-style activation as used in vq_gan_3d (batch=2, channels=4,
    # depth=4, spatial 16x16) -> single-block path.
    x = jax.random.normal(k1, (2, 4, 4, 16, 16), dtype=jnp.float32)
    y = jax.block_until_ready(silu_pallas(x))
    y_ref = x * jax.nn.sigmoid(x)
    assert y.shape == x.shape and y.dtype == x.dtype
    assert jnp.allclose(y, y_ref, **TOL)

    # Larger input -> multi-step pipelined ("parallel") grid.
    xb = jax.random.normal(k2, (2, 4, 8, 32, 32), dtype=jnp.float32)
    yb = jax.block_until_ready(silu_pallas(xb))
    yb_ref = xb * jax.nn.sigmoid(xb)
    assert yb.shape == xb.shape and yb.dtype == xb.dtype
    assert jnp.allclose(yb, yb_ref, **TOL)

    # bf16 input: native bf16 compute on v6e/v7x, f32 compute on v5e.
    xh = xb.astype(jnp.bfloat16)
    yh = jax.block_until_ready(silu_pallas(xh))
    yh_ref = (xb * jax.nn.sigmoid(xb)).astype(jnp.bfloat16)
    assert yh.shape == xh.shape and yh.dtype == jnp.bfloat16
    assert jnp.allclose(yh.astype(jnp.float32), yh_ref.astype(jnp.float32),
                        atol=5e-2, rtol=5e-2)

    # Ragged size (n % 128 != 0): aligned prefix through the kernel + XLA tail.
    xr = jax.random.normal(k3, (3, 5, 67), dtype=jnp.float32)  # 1005 elements
    yr = jax.block_until_ready(silu_pallas(xr))
    yr_ref = xr * jax.nn.sigmoid(xr)
    assert yr.shape == xr.shape and yr.dtype == xr.dtype
    assert jnp.allclose(yr, yr_ref, **TOL)

    # Sub-128-element input exercises the tail-only path.
    xs = jax.random.normal(k3, (3, 5, 7), dtype=jnp.float32)
    ys = jax.block_until_ready(silu_pallas(xs))
    assert ys.shape == xs.shape and ys.dtype == xs.dtype
    assert jnp.allclose(ys, xs * jax.nn.sigmoid(xs), **TOL)

    print("KERNEL_OK")
</pallas_src>

<mosaic_0001>
module attributes {stable_mosaic.version = 11 : i64} {
  func.func @kernel(%arg0: i32, %arg1: memref<4x2048xf32, #tpu.memory_space<vmem>>, %arg2: memref<4x2048xf32, #tpu.memory_space<vmem>>) attributes {dimension_semantics = [#tpu.dimension_semantics<parallel>], iteration_bounds = array<i64: 1>, scalar_prefetch = 0 : i64, scratch_operands = 0 : i64, tpu.core_type = #tpu.core_type<tc>, window_params = [{transform_indices = @transform_0, window_bounds = array<i64: 4, 2048>}, {transform_indices = @transform_1, window_bounds = array<i64: 4, 2048>}]} {
    %c0 = arith.constant 0 : index
    %c0_0 = arith.constant 0 : index
    %0 = vector.load %arg1[%c0, %c0_0] : memref<4x2048xf32, #tpu.memory_space<vmem>>, vector<4x2048xf32>
    %1 = arith.negf %0 : vector<4x2048xf32>
    %2 = math.exp %1 : vector<4x2048xf32>
    %cst = arith.constant 1.000000e+00 : f32
    %3 = vector.broadcast %cst : f32 to vector<4x2048xf32>
    %4 = arith.addf %3, %2 : vector<4x2048xf32>
    %5 = arith.divf %3, %4 : vector<4x2048xf32>
    %6 = arith.mulf %0, %5 : vector<4x2048xf32>
    %c0_1 = arith.constant 0 : index
    %c0_2 = arith.constant 0 : index
    %7 = vector.load %arg2[%c0_1, %c0_2] : memref<4x2048xf32, #tpu.memory_space<vmem>>, vector<4x2048xf32>
    tpu.vector_store %arg2[%c0_1, %c0_2], %6 {strides = array<i32>} : memref<4x2048xf32, #tpu.memory_space<vmem>>, vector<4x2048xf32>,
    return
  }
  func.func @transform_0(%arg0: i32) -> (i32, i32) {
    %c0_i32 = arith.constant 0 : i32
    %c0_i32_0 = arith.constant 0 : i32
    return %arg0, %c0_i32 : i32, i32
  }
  func.func @transform_1(%arg0: i32) -> (i32, i32) {
    %c0_i32 = arith.constant 0 : i32
    %c0_i32_0 = arith.constant 0 : i32
    return %arg0, %c0_i32 : i32, i32
  }
}

</mosaic_0001>

<llo_original>
// kernel: tpu_custom_call.1
$region0: #{tpu_custom_call.1}
  #allocation0 [shape = 'u32[]', space=smem, size = 0x4, offset = 0x4, fixed_abs, tag = 'smem constant byte address 0x4 - core index']
  #allocation1 [shape = 'u32[72,128]{1,0:T(1,128)}', space=vmem, size = 0x9000, scoped, tag = 'internal scratch']
  %s0 = inlined_call_operand.hbm [shape: f32[4,2048], index: 0, kind: input, shape index: {}]
  %s1 = inlined_call_operand.hbm [shape: f32[4,2048], index: 1, kind: output, shape index: {}]
  %s2 = sld [smem:[#allocation0]]
  $region18: #{tpu_custom_call.1} parent=0
    _
  %s4 = ssub.s32 1, %s2
  %s5 = scalar_select 0, %s4, %s2
  $region1: #{tpu_custom_call.1} parent=0
    #allocation2 [shape = 'u8[32768]{0}', space=vmem, size = 0x8000, scoped, tag = 'input window, operand 0, single buffered']
    #allocation3 [shape = 's32[1]{0}', space=sflag, size = 0x4, scoped, tag = 'scoped memory for tpu_custom_call.1']
    #allocation4 [shape = 's32[1]{0}', space=sflag, size = 0x4, scoped, tag = 'scoped memory for tpu_custom_call.1']
    #allocation5 [shape = 'u8[32768]{0}', space=vmem, size = 0x8000, scoped, tag = 'output window, operand 0, single buffered']
    %6 = vsyncpa [#allocation3], 0
    %7 = vsyncpa [#allocation4], 0
    // Predicated region
    $region2: #{tpu_custom_call.1} parent=1 // pred_check
      _
    $region3: #{tpu_custom_call.1} parent=1 // pred_check_branch
      %9 = sbr.rel (0) target = $region5
    $region4: #{tpu_custom_call.1} parent=1 // pred_region
      %11 = vsyncadd [#allocation3], 0
      %s13 = sshll.u32 %s0, 4
      %s14 = int_to_ptr.hbm [resolvable:$true] %s13
      %s15 = sshll.u32 [#allocation2], 4
      %s16 = int_to_ptr.vmem [resolvable:$true] %s15
      %18 = dma.hbm_to_vmem [thread:$0]  %s14, 1024, %s16, [#allocation3]
    $region5: #{tpu_custom_call.1} parent=1 // pred_fallthru
      _
    // Predicated region
    $region6: #{tpu_custom_call.1} parent=1 // pred_check
      _
    $region7: #{tpu_custom_call.1} parent=1 // pred_check_branch
      %20 = sbr.rel (0) target = $region9
    $region8: #{tpu_custom_call.1} parent=1 // pred_region
      %22 = dma.done [#allocation3], 1024
    $region9: #{tpu_custom_call.1} parent=1 // pred_fallthru
      _
    %v23 = vld [vmem:[#allocation2] sm:$0xff]
    %v24 = vld [vmem:[#allocation2 + $0x8] sm:$0xff]
    %v25 = vld [vmem:[#allocation2 + $0x10] sm:$0xff]
    %v26 = vld [vmem:[#allocation2 + $0x18] sm:$0xff]
    %v27 = vld [vmem:[#allocation2 + $0x20] sm:$0xff]
    %v28 = vld [vmem:[#allocation2 + $0x28] sm:$0xff]
    %v29 = vld [vmem:[#allocation2 + $0x30] sm:$0xff]
    %v30 = vld [vmem:[#allocation2 + $0x38] sm:$0xff]
    %v31 = vxor.u32 %v23, 2147483648
    %v32 = vxor.u32 %v24, 2147483648
    %v33 = vxor.u32 %v25, 2147483648
    %v34 = vxor.u32 %v26, 2147483648
    %v35 = vxor.u32 %v27, 2147483648
    %v36 = vxor.u32 %v28, 2147483648
    %v37 = vxor.u32 %v29, 2147483648
    %v38 = vxor.u32 %v30, 2147483648
    %v39 = vmul.f32 %v31, 1.442695
    %v40 = vpow.pop %v39
    %v41 = vmul.f32 %v32, 1.442695
    %v42 = vpow.pop %v41
    %v43 = vmul.f32 %v33, 1.442695
    %v44 = vpow.pop %v43
    %v45 = vmul.f32 %v34, 1.442695
    %v46 = vpow.pop %v45
    %v47 = vmul.f32 %v35, 1.442695
    %v48 = vpow.pop %v47
    %v49 = vmul.f32 %v36, 1.442695
    %v50 = vpow.pop %v49
    %v51 = vmul.f32 %v37, 1.442695
    %v52 = vpow.pop %v51
    %v53 = vmul.f32 %v38, 1.442695
    %v54 = vpow.pop %v53
    %v55 = vadd.f32 %v40, 1.0
    %v56 = vadd.f32 %v42, 1.0
    %v57 = vadd.f32 %v44, 1.0
    %v58 = vadd.f32 %v46, 1.0
    %v59 = vadd.f32 %v48, 1.0
    %v60 = vadd.f32 %v50, 1.0
    %v61 = vadd.f32 %v52, 1.0
    %v62 = vadd.f32 %v54, 1.0
    %v63 = vrcp.pop %v55
    %v64 = vmul.f32 %v55, %v63
    %v65 = vsub.f32 1.0, %v64
    %v66 = vmul.f32 %v63, %v65
    %v67 = vadd.f32 %v63, %v66
    %vm68 = vweird.f32 %v55
    %vm69 = vweird.f32 %v63
    %vm70 = vmor %vm68, %vm69
    %v71 = vsel %vm70, %v63, %v67
    %v72 = vand.u32 2147483647, %v55
    %vm73 = vcmp.eq.f32.partialorder %v72, 8.507059e+37
    %v74 = vand.u32 %v55, 2147483648
    %v75 = vor.u32 1.1754944e-38, %v74
    %v76 = vsel %vm73, %v75, %v71
    %v77 = vmul.f32 1.0, %v76
    %v78 = vrcp.pop %v56
    %v79 = vmul.f32 %v56, %v78
    %v80 = vsub.f32 1.0, %v79
    %v81 = vmul.f32 %v78, %v80
    %v82 = vadd.f32 %v78, %v81
    %vm83 = vweird.f32 %v56
    %vm84 = vweird.f32 %v78
    %vm85 = vmor %vm83, %vm84
    %v86 = vsel %vm85, %v78, %v82
    %v87 = vand.u32 2147483647, %v56
    %vm88 = vcmp.eq.f32.partialorder %v87, 8.507059e+37
    %v89 = vand.u32 %v56, 2147483648
    %v90 = vor.u32 1.1754944e-38, %v89
    %v91 = vsel %vm88, %v90, %v86
    %v92 = vmul.f32 1.0, %v91
    %v93 = vrcp.pop %v57
    %v94 = vmul.f32 %v57, %v93
    %v95 = vsub.f32 1.0, %v94
    %v96 = vmul.f32 %v93, %v95
    %v97 = vadd.f32 %v93, %v96
    %vm98 = vweird.f32 %v57
    %vm99 = vweird.f32 %v93
    %vm100 = vmor %vm98, %vm99
    %v101 = vsel %vm100, %v93, %v97
    %v102 = vand.u32 2147483647, %v57
    %vm103 = vcmp.eq.f32.partialorder %v102, 8.507059e+37
    %v104 = vand.u32 %v57, 2147483648
    %v105 = vor.u32 1.1754944e-38, %v104
    %v106 = vsel %vm103, %v105, %v101
    %v107 = vmul.f32 1.0, %v106
    %v108 = vrcp.pop %v58
    %v109 = vmul.f32 %v58, %v108
    %v110 = vsub.f32 1.0, %v109
    %v111 = vmul.f32 %v108, %v110
    %v112 = vadd.f32 %v108, %v111
    %vm113 = vweird.f32 %v58
    %vm114 = vweird.f32 %v108
    %vm115 = vmor %vm113, %vm114
    %v116 = vsel %vm115, %v108, %v112
    %v117 = vand.u32 2147483647, %v58
    %vm118 = vcmp.eq.f32.partialorder %v117, 8.507059e+37
    %v119 = vand.u32 %v58, 2147483648
    %v120 = vor.u32 1.1754944e-38, %v119
    %v121 = vsel %vm118, %v120, %v116
    %v122 = vmul.f32 1.0, %v121
    %v123 = vrcp.pop %v59
    %v124 = vmul.f32 %v59, %v123
    %v125 = vsub.f32 1.0, %v124
    %v126 = vmul.f32 %v123, %v125
    %v127 = vadd.f32 %v123, %v126
    %vm128 = vweird.f32 %v59
    %vm129 = vweird.f32 %v123
    %vm130 = vmor %vm128, %vm129
    %v131 = vsel %vm130, %v123, %v127
    %v132 = vand.u32 2147483647, %v59
    %vm133 = vcmp.eq.f32.partialorder %v132, 8.507059e+37
    %v134 = vand.u32 %v59, 2147483648
    %v135 = vor.u32 1.1754944e-38, %v134
    %v136 = vsel %vm133, %v135, %v131
    %v137 = vmul.f32 1.0, %v136
    %v138 = vrcp.pop %v60
    %v139 = vmul.f32 %v60, %v138
    %v140 = vsub.f32 1.0, %v139
    %v141 = vmul.f32 %v138, %v140
    %v142 = vadd.f32 %v138, %v141
    %vm143 = vweird.f32 %v60
    %vm144 = vweird.f32 %v138
    %vm145 = vmor %vm143, %vm144
    %v146 = vsel %vm145, %v138, %v142
    %v147 = vand.u32 2147483647, %v60
    %vm148 = vcmp.eq.f32.partialorder %v147, 8.507059e+37
    %v149 = vand.u32 %v60, 2147483648
    %v150 = vor.u32 1.1754944e-38, %v149
    %v151 = vsel %vm148, %v150, %v146
    %v152 = vmul.f32 1.0, %v151
    %v153 = vrcp.pop %v61
    %v154 = vmul.f32 %v61, %v153
    %v155 = vsub.f32 1.0, %v154
    %v156 = vmul.f32 %v153, %v155
    %v157 = vadd.f32 %v153, %v156
    %vm158 = vweird.f32 %v61
    %vm159 = vweird.f32 %v153
    %vm160 = vmor %vm158, %vm159
    %v161 = vsel %vm160, %v153, %v157
    %v162 = vand.u32 2147483647, %v61
    %vm163 = vcmp.eq.f32.partialorder %v162, 8.507059e+37
    %v164 = vand.u32 %v61, 2147483648
    %v165 = vor.u32 1.1754944e-38, %v164
    %v166 = vsel %vm163, %v165, %v161
    %v167 = vmul.f32 1.0, %v166
    %v168 = vrcp.pop %v62
    %v169 = vmul.f32 %v62, %v168
    %v170 = vsub.f32 1.0, %v169
    %v171 = vmul.f32 %v168, %v170
    %v172 = vadd.f32 %v168, %v171
    %vm173 = vweird.f32 %v62
    %vm174 = vweird.f32 %v168
    %vm175 = vmor %vm173, %vm174
    %v176 = vsel %vm175, %v168, %v172
    %v177 = vand.u32 2147483647, %v62
    %vm178 = vcmp.eq.f32.partialorder %v177, 8.507059e+37
    %v179 = vand.u32 %v62, 2147483648
    %v180 = vor.u32 1.1754944e-38, %v179
    %v181 = vsel %vm178, %v180, %v176
    %v182 = vmul.f32 1.0, %v181
    %v183 = vmul.f32 %v23, %v77
    %v184 = vmul.f32 %v24, %v92
    %v185 = vmul.f32 %v25, %v107
    %v186 = vmul.f32 %v26, %v122
    %v187 = vmul.f32 %v27, %v137
    %v188 = vmul.f32 %v28, %v152
    %v189 = vmul.f32 %v29, %v167
    %v190 = vmul.f32 %v30, %v182
    %191 = vst [vmem:[#allocation5] sm:$0xff] %v183
    %192 = vst [vmem:[#allocation5 + $0x8] sm:$0xff] %v184
    %193 = vst [vmem:[#allocation5 + $0x10] sm:$0xff] %v185
    %194 = vst [vmem:[#allocation5 + $0x18] sm:$0xff] %v186
    %195 = vst [vmem:[#allocation5 + $0x20] sm:$0xff] %v187
    %196 = vst [vmem:[#allocation5 + $0x28] sm:$0xff] %v188
    %197 = vst [vmem:[#allocation5 + $0x30] sm:$0xff] %v189
    %198 = vst [vmem:[#allocation5 + $0x38] sm:$0xff] %v190
    // Predicated region
    $region10: #{tpu_custom_call.1} parent=1 // pred_check
      _
    $region11: #{tpu_custom_call.1} parent=1 // pred_check_branch
      %200 = sbr.rel (0) target = $region13
    $region12: #{tpu_custom_call.1} parent=1 // pred_region
      %202 = vsyncadd [#allocation4], 0
      %s204 = sshll.u32 [#allocation5], 4
      %s205 = int_to_ptr.vmem [resolvable:$true] %s204
      %s206 = sshll.u32 %s1, 4
      %s207 = int_to_ptr.hbm [resolvable:$true] %s206
      %209 = dma.vmem_to_hbm [thread:$0]  %s205, 1024, %s207, [#allocation4]
    $region13: #{tpu_custom_call.1} parent=1 // pred_fallthru
      _
    // Predicated region
    $region14: #{tpu_custom_call.1} parent=1 // pred_check
      _
    $region15: #{tpu_custom_call.1} parent=1 // pred_check_branch
      %211 = sbr.rel (0) target = $region17
    $region16: #{tpu_custom_call.1} parent=1 // pred_region
      %213 = dma.done [#allocation4], 1024
    $region17: #{tpu_custom_call.1} parent=1 // pred_fallthru
      _
    %214 = vsyncpa [#allocation3], 1
    %215 = vsyncpa [#allocation4], 1

</llo_original>
